<compile_context>
chip_gen: v5e
topology: v5e:2x2
jax: 0.10.0
libtpu: 0.0.40
codegen_flags: <defaults>
</compile_context>

<pallas_src>
import jax
import jax.numpy as jnp
from jax.experimental import pallas as pl
from jax.experimental.pallas import tpu as pltpu

_LANE = 128
_H1, _H2 = 64, 32


def mlp_kernel(x_ref, w1_ref, b1_ref, w2_ref, b2_ref, w3_ref, b3_ref, o_ref):
    x = x_ref[...]                                            # (F, bt) bf16
    # Layer 1: (64, F) @ (F, bt) on the MXU, f32 accumulation.
    h1 = jnp.dot(w1_ref[...], x, preferred_element_type=jnp.float32)
    h1 = jnp.maximum(h1 + b1_ref[...], 0.0)                   # (64, bt) f32, lane-dense
    # Dropout(0.1) -> identity at inference time.
    # Layer 2: (32, 64) @ (64, bt) on the MXU.
    h2 = jnp.dot(w2_ref[...], h1.astype(jnp.bfloat16),
                 preferred_element_type=jnp.float32)
    h2 = jnp.maximum(h2 + b2_ref[...], 0.0)                   # (32, bt) f32
    # Layer 3 (32 -> 1): VPU broadcast-mul + XLU sublane reduce; skip the MXU.
    out = jnp.sum(w3_ref[...] * h2, axis=0, keepdims=True) + b3_ref[...]
    o_ref[...] = out.astype(o_ref.dtype)                      # (1, bt) lane-dense store


def _pick_batch_tile(F, B, batch_tile):
    """Lane-aligned tile, clamped for small batches and for v7x's 32 MiB scoped VMEM."""
    bt = max(_LANE, (batch_tile // _LANE) * _LANE)
    b_lane = pl.cdiv(B, _LANE) * _LANE          # no point padding past the batch
    bt = min(bt, b_lane)

    def vmem_est(t):
        x_tile = 2 * F * t * 2                          # double-buffered bf16 input tile
        o_tile = 2 * 1 * t * 4                          # double-buffered f32 output tile
        act = (2 * _H1 + 2 * _H2 + 1) * t * 4           # in-kernel activation working set
        wts = (F * _H1 + _H1 * _H2) * 2 + (_H1 + 2 * _H2 + 2) * 4
        return x_tile + o_tile + act + wts

    budget = 24 * 1024 * 1024                           # comfortable on v5e/v6e/v7x
    while bt > _LANE and vmem_est(bt) > budget:
        bt = max(_LANE, (bt // 2) // _LANE * _LANE)
    return bt


def f1_predictor_forward(x, params, *, batch_tile=512):
    """x: [B, F] float32. params: PyTorch-layout (out,in) weights. Returns [B, 1] f32."""
    B, F = x.shape

    bt = _pick_batch_tile(F, B, batch_tile)
    B_pad = pl.cdiv(B, bt) * bt
    grid_n = B_pad // bt
    # NOTE(v7x): with 2 TensorCores/chip, prefer batches giving an even grid of
    # >= 2 steps so dimension_semantics=("parallel",) shards across both cores.

    # Layout plumbing (outside the kernel): batch onto the lane axis, bf16 stream,
    # zero-pad the batch tail (padded columns are sliced off below).
    x_t = jnp.pad(x.T.astype(jnp.bfloat16), ((0, 0), (0, B_pad - B)))   # (F, B_pad)

    w1 = params["w1"].astype(jnp.bfloat16)            # (64, F)   MXU input
    b1 = params["b1"].reshape(_H1, 1)                 # (64, 1)   f32 column
    w2 = params["w2"].astype(jnp.bfloat16)            # (32, 64)  MXU input
    b2 = params["b2"].reshape(_H2, 1)                 # (32, 1)
    w3 = params["w3"].reshape(_H2, 1)                 # (32, 1)   f32 (layer 3 on VPU/XLU)
    b3 = params["b3"].reshape(1, 1)                   # (1, 1)

    # Weights/biases: full-array blocks with a constant index_map -> VMEM-resident
    # across all grid steps; only the x tile and the tiny output move per step.
    full = lambda a: pl.BlockSpec(a.shape, lambda i: (0,) * a.ndim)

    out = pl.pallas_call(
        mlp_kernel,
        out_shape=jax.ShapeDtypeStruct((1, B_pad), jnp.float32),
        grid_spec=pl.GridSpec(
            grid=(grid_n,),
            in_specs=[
                pl.BlockSpec((F, bt), lambda i: (0, i)),          # streamed x tile
                full(w1), full(b1),                               # layer 1
                full(w2), full(b2),                               # layer 2
                full(w3), full(b3),                               # layer 3
            ],
            out_specs=pl.BlockSpec((1, bt), lambda i: (0, i)),    # lane-dense output slab
        ),
        compiler_params=pltpu.CompilerParams(
            dimension_semantics=("parallel",),
            vmem_limit_bytes=32 * 1024 * 1024,
        ),
    )(x_t, w1, b1, w2, b2, w3, b3)

    return out[0, :B].reshape(B, 1)


def init_params(key, input_size):
    """Deterministic PyTorch-style (uniform +/- 1/sqrt(fan_in)) init, (out,in) layout."""
    dims = [(input_size, _H1), (_H1, _H2), (_H2, 1)]
    params = {}
    for idx, (fan_in, fan_out) in enumerate(dims, start=1):
        key, kw, kb = jax.random.split(key, 3)
        bound = 1.0 / (fan_in ** 0.5)
        params[f"w{idx}"] = jax.random.uniform(
            kw, (fan_out, fan_in), jnp.float32, -bound, bound)
        params[f"b{idx}"] = jax.random.uniform(
            kb, (fan_out,), jnp.float32, -bound, bound)
    return params


def reference_forward(x, params):
    h1 = jnp.maximum(x @ params["w1"].T + params["b1"], 0.0)
    h2 = jnp.maximum(h1 @ params["w2"].T + params["b2"], 0.0)
    return h2 @ params["w3"].T + params["b3"]


if __name__ == "__main__":
    key = jax.random.PRNGKey(0)
    input_size = 16   # stand-in for X.shape[1] (tabular feature count)
    batch = 8

    kx, kp = jax.random.split(key)
    x = jax.random.normal(kx, (batch, input_size), jnp.float32)
    params = init_params(kp, input_size)

    out = jax.block_until_ready(f1_predictor_forward(x, params))
    ref = reference_forward(x, params)

    assert out.shape == (batch, 1)
    # bf16 matmul inputs (f32 accumulation) vs pure-f32 reference -> relaxed tol.
    assert jnp.allclose(out, ref, atol=3e-2, rtol=3e-2), "mismatch vs JAX f32 reference"

    print("KERNEL_OK")
</pallas_src>

<mosaic_0001>
module attributes {stable_mosaic.version = 11 : i64} {
  func.func @mlp_kernel(%arg0: i32, %arg1: memref<16x128xbf16, #tpu.memory_space<vmem>>, %arg2: memref<64x16xbf16, #tpu.memory_space<vmem>>, %arg3: memref<64x1xf32, #tpu.memory_space<vmem>>, %arg4: memref<32x64xbf16, #tpu.memory_space<vmem>>, %arg5: memref<32x1xf32, #tpu.memory_space<vmem>>, %arg6: memref<32x1xf32, #tpu.memory_space<vmem>>, %arg7: memref<1x1xf32, #tpu.memory_space<vmem>>, %arg8: memref<1x128xf32, #tpu.memory_space<vmem>>) attributes {dimension_semantics = [#tpu.dimension_semantics<parallel>], iteration_bounds = array<i64: 1>, scalar_prefetch = 0 : i64, scratch_operands = 0 : i64, tpu.core_type = #tpu.core_type<tc>, window_params = [{transform_indices = @transform_0, window_bounds = array<i64: 16, 128>}, {pipeline_mode = #tpu.pipeline_mode<synchronous>, transform_indices = @transform_1, window_bounds = array<i64: 64, 16>}, {pipeline_mode = #tpu.pipeline_mode<synchronous>, transform_indices = @transform_2, window_bounds = array<i64: 64, 1>}, {pipeline_mode = #tpu.pipeline_mode<synchronous>, transform_indices = @transform_3, window_bounds = array<i64: 32, 64>}, {pipeline_mode = #tpu.pipeline_mode<synchronous>, transform_indices = @transform_4, window_bounds = array<i64: 32, 1>}, {pipeline_mode = #tpu.pipeline_mode<synchronous>, transform_indices = @transform_5, window_bounds = array<i64: 32, 1>}, {pipeline_mode = #tpu.pipeline_mode<synchronous>, transform_indices = @transform_6, window_bounds = array<i64: 1, 1>}, {transform_indices = @transform_7, window_bounds = array<i64: 1, 128>}]} {
    %c0 = arith.constant 0 : index
    %c0_0 = arith.constant 0 : index
    %0 = vector.load %arg1[%c0, %c0_0] : memref<16x128xbf16, #tpu.memory_space<vmem>>, vector<16x128xbf16>
    %c0_1 = arith.constant 0 : index
    %c0_2 = arith.constant 0 : index
    %1 = vector.load %arg2[%c0_1, %c0_2] : memref<64x16xbf16, #tpu.memory_space<vmem>>, vector<64x16xbf16>
    %cst = arith.constant dense<0.000000e+00> : vector<64x128xf32>
    %2 = tpu.matmul %1, %0, %cst {dimension_numbers = #tpu.dot_dimension_numbers<[1], [0], [0], [1], [0, 0, 1, 1], [], []>} : vector<64x16xbf16>, vector<16x128xbf16>, vector<64x128xf32> -> vector<64x128xf32>
    %c0_3 = arith.constant 0 : index
    %c0_4 = arith.constant 0 : index
    %3 = vector.load %arg3[%c0_3, %c0_4] : memref<64x1xf32, #tpu.memory_space<vmem>>, vector<64x1xf32>
    %4 = vector.broadcast %3 : vector<64x1xf32> to vector<64x128xf32>
    %5 = arith.addf %2, %4 : vector<64x128xf32>
    %cst_5 = arith.constant 0.000000e+00 : f32
    %6 = vector.broadcast %cst_5 : f32 to vector<64x128xf32>
    %7 = arith.maximumf %5, %6 : vector<64x128xf32>
    %c0_6 = arith.constant 0 : index
    %c0_7 = arith.constant 0 : index
    %8 = vector.load %arg4[%c0_6, %c0_7] : memref<32x64xbf16, #tpu.memory_space<vmem>>, vector<32x64xbf16>
    %9 = arith.truncf %7 : vector<64x128xf32> to vector<64x128xbf16>
    %cst_8 = arith.constant dense<0.000000e+00> : vector<32x128xf32>
    %10 = tpu.matmul %8, %9, %cst_8 {dimension_numbers = #tpu.dot_dimension_numbers<[1], [0], [0], [1], [0, 0, 1, 1], [], []>} : vector<32x64xbf16>, vector<64x128xbf16>, vector<32x128xf32> -> vector<32x128xf32>
    %c0_9 = arith.constant 0 : index
    %c0_10 = arith.constant 0 : index
    %11 = vector.load %arg5[%c0_9, %c0_10] : memref<32x1xf32, #tpu.memory_space<vmem>>, vector<32x1xf32>
    %12 = vector.broadcast %11 : vector<32x1xf32> to vector<32x128xf32>
    %13 = arith.addf %10, %12 : vector<32x128xf32>
    %cst_11 = arith.constant 0.000000e+00 : f32
    %14 = vector.broadcast %cst_11 : f32 to vector<32x128xf32>
    %15 = arith.maximumf %13, %14 : vector<32x128xf32>
    %c0_12 = arith.constant 0 : index
    %c0_13 = arith.constant 0 : index
    %16 = vector.load %arg6[%c0_12, %c0_13] : memref<32x1xf32, #tpu.memory_space<vmem>>, vector<32x1xf32>
    %17 = vector.broadcast %16 : vector<32x1xf32> to vector<32x128xf32>
    %18 = arith.mulf %17, %15 : vector<32x128xf32>
    %cst_14 = arith.constant dense<0.000000e+00> : vector<128xf32>
    %19 = vector.multi_reduction <add>, %18, %cst_14 [0] : vector<32x128xf32> to vector<128xf32>
    %20 = vector.shape_cast %19 : vector<128xf32> to vector<1x128xf32>
    %c0_15 = arith.constant 0 : index
    %c0_16 = arith.constant 0 : index
    %21 = vector.load %arg7[%c0_15, %c0_16] : memref<1x1xf32, #tpu.memory_space<vmem>>, vector<1x1xf32>
    %22 = vector.broadcast %21 : vector<1x1xf32> to vector<1x128xf32>
    %23 = arith.addf %20, %22 : vector<1x128xf32>
    %c0_17 = arith.constant 0 : index
    %c0_18 = arith.constant 0 : index
    %24 = vector.load %arg8[%c0_17, %c0_18] : memref<1x128xf32, #tpu.memory_space<vmem>>, vector<1x128xf32>
    tpu.vector_store %arg8[%c0_17, %c0_18], %23 {strides = array<i32>} : memref<1x128xf32, #tpu.memory_space<vmem>>, vector<1x128xf32>,
    return
  }
  func.func @transform_0(%arg0: i32) -> (i32, i32) {
    %c0_i32 = arith.constant 0 : i32
    %c0_i32_0 = arith.constant 0 : i32
    return %c0_i32, %arg0 : i32, i32
  }
  func.func @transform_1(%arg0: i32) -> (i32, i32) {
    %c0_i32 = arith.constant 0 : i32
    %c0_i32_0 = arith.constant 0 : i32
    %c0_i32_1 = arith.constant 0 : i32
    return %c0_i32, %c0_i32_0 : i32, i32
  }
  func.func @transform_2(%arg0: i32) -> (i32, i32) {
    %c0_i32 = arith.constant 0 : i32
    %c0_i32_0 = arith.constant 0 : i32
    %c0_i32_1 = arith.constant 0 : i32
    return %c0_i32, %c0_i32_0 : i32, i32
  }
  func.func @transform_3(%arg0: i32) -> (i32, i32) {
    %c0_i32 = arith.constant 0 : i32
    %c0_i32_0 = arith.constant 0 : i32
    %c0_i32_1 = arith.constant 0 : i32
    return %c0_i32, %c0_i32_0 : i32, i32
  }
  func.func @transform_4(%arg0: i32) -> (i32, i32) {
    %c0_i32 = arith.constant 0 : i32
    %c0_i32_0 = arith.constant 0 : i32
    %c0_i32_1 = arith.constant 0 : i32
    return %c0_i32, %c0_i32_0 : i32, i32
  }
  func.func @transform_5(%arg0: i32) -> (i32, i32) {
    %c0_i32 = arith.constant 0 : i32
    %c0_i32_0 = arith.constant 0 : i32
    %c0_i32_1 = arith.constant 0 : i32
    return %c0_i32, %c0_i32_0 : i32, i32
  }
  func.func @transform_6(%arg0: i32) -> (i32, i32) {
    %c0_i32 = arith.constant 0 : i32
    %c0_i32_0 = arith.constant 0 : i32
    %c0_i32_1 = arith.constant 0 : i32
    return %c0_i32, %c0_i32_0 : i32, i32
  }
  func.func @transform_7(%arg0: i32) -> (i32, i32) {
    %c0_i32 = arith.constant 0 : i32
    %c0_i32_0 = arith.constant 0 : i32
    return %c0_i32, %arg0 : i32, i32
  }
}

</mosaic_0001>

<llo_original>
// kernel: tpu_custom_call.1
$region0: #{tpu_custom_call.1}
  #allocation0 [shape = 'u32[]', space=smem, size = 0x4, offset = 0x4, fixed_abs, tag = 'smem constant byte address 0x4 - core index']
  #allocation1 [shape = 'u32[72,128]{1,0:T(1,128)}', space=vmem, size = 0x9000, scoped, tag = 'internal scratch']
  #allocation2 [shape = 'f32[1,1]{1,0:T(1,128)S(1)}', space=vmem, size = 0x200, scoped, tag = 'scoped memory for tpu_custom_call.1']
  %s0 = inlined_call_operand.vmem [shape: bf16[16,128], index: 0, kind: input, shape index: {}]
  %s1 = inlined_call_operand.vmem [shape: bf16[64,16], index: 1, kind: input, shape index: {}]
  %s2 = inlined_call_operand.vmem [shape: f32[64,1], index: 2, kind: input, shape index: {}]
  %s3 = inlined_call_operand.vmem [shape: bf16[32,64], index: 3, kind: input, shape index: {}]
  %s4 = inlined_call_operand.vmem [shape: f32[32,1], index: 4, kind: input, shape index: {}]
  %s5 = inlined_call_operand.vmem [shape: f32[32,1], index: 5, kind: input, shape index: {}]
  %s6 = inlined_call_operand.<no memory space> [shape: f32[1,1], index: 6, kind: input, shape index: {}]
  %s7 = inlined_call_operand.hbm [shape: f32[1,128], index: 7, kind: output, shape index: {}]
  %s8 = sld [smem:[#allocation0]]
  $region38: #{tpu_custom_call.1} parent=0
    _
  %s10 = ssub.s32 1, %s8
  %s11 = scalar_select 0, %s10, %s8
  %v12 = vstv %s6
  %13 = vst [vmem:[#allocation2] sm:$0x1] %v12
  $region1: #{tpu_custom_call.1} parent=0
    #allocation3 [shape = 'u8[512]{0}', space=vmem, size = 0x400, scoped, tag = 'output window, operand 0, single buffered']
    #allocation4 [shape = 's32[1]{0}', space=sflag, size = 0x4, scoped, tag = 'scoped memory for tpu_custom_call.1']
    %14 = vsyncpa [#allocation4], 0
    // Predicated region
    $region2: #{tpu_custom_call.1} parent=1 // pred_check
      _
    $region3: #{tpu_custom_call.1} parent=1 // pred_check_branch
      %16 = sbr.rel (0) target = $region5
    $region4: #{tpu_custom_call.1} parent=1 // pred_region
      _
    $region5: #{tpu_custom_call.1} parent=1 // pred_fallthru
      _
    // Predicated region
    $region6: #{tpu_custom_call.1} parent=1 // pred_check
      _
    $region7: #{tpu_custom_call.1} parent=1 // pred_check_branch
      %18 = sbr.rel (0) target = $region9
    $region8: #{tpu_custom_call.1} parent=1 // pred_region
      _
    $region9: #{tpu_custom_call.1} parent=1 // pred_fallthru
      _
    // Predicated region
    $region10: #{tpu_custom_call.1} parent=1 // pred_check
      _
    $region11: #{tpu_custom_call.1} parent=1 // pred_check_branch
      %20 = sbr.rel (0) target = $region13
    $region12: #{tpu_custom_call.1} parent=1 // pred_region
      _
    $region13: #{tpu_custom_call.1} parent=1 // pred_fallthru
      _
    // Predicated region
    $region14: #{tpu_custom_call.1} parent=1 // pred_check
      _
    $region15: #{tpu_custom_call.1} parent=1 // pred_check_branch
      %22 = sbr.rel (0) target = $region17
    $region16: #{tpu_custom_call.1} parent=1 // pred_region
      _
    $region17: #{tpu_custom_call.1} parent=1 // pred_fallthru
      _
    // Predicated region
    $region18: #{tpu_custom_call.1} parent=1 // pred_check
      _
    $region19: #{tpu_custom_call.1} parent=1 // pred_check_branch
      %24 = sbr.rel (0) target = $region21
    $region20: #{tpu_custom_call.1} parent=1 // pred_region
      _
    $region21: #{tpu_custom_call.1} parent=1 // pred_fallthru
      _
    // Predicated region
    $region22: #{tpu_custom_call.1} parent=1 // pred_check
      _
    $region23: #{tpu_custom_call.1} parent=1 // pred_check_branch
      %26 = sbr.rel (0) target = $region25
    $region24: #{tpu_custom_call.1} parent=1 // pred_region
      _
    $region25: #{tpu_custom_call.1} parent=1 // pred_fallthru
      _
    // Predicated region
    $region26: #{tpu_custom_call.1} parent=1 // pred_check
      _
    $region27: #{tpu_custom_call.1} parent=1 // pred_check_branch
      %28 = sbr.rel (0) target = $region29
    $region28: #{tpu_custom_call.1} parent=1 // pred_region
      _
    $region29: #{tpu_custom_call.1} parent=1 // pred_fallthru
      _
    %v30 = vld [vmem:[%s0] sm:$0xf]
    %v31 = vld [vmem:[%s0 + $0x4] sm:$0xf]
    %v32 = vld [vmem:[%s1] sm:$0xf]
    %v33 = vld [vmem:[%s1 + $0x4] sm:$0xf]
    %v34 = vld [vmem:[%s1 + $0x8] sm:$0xf]
    %v35 = vld [vmem:[%s1 + $0xc] sm:$0xf]
    %v36 = vld [vmem:[%s1 + $0x10] sm:$0xf]
    %v37 = vld [vmem:[%s1 + $0x14] sm:$0xf]
    %v38 = vld [vmem:[%s1 + $0x18] sm:$0xf]
    %v39 = vld [vmem:[%s1 + $0x1c] sm:$0xf]
    %v40 = vld [vmem:[%s2] sm:$0xff]
    %v41 = vld [vmem:[%s2 + $0x8] sm:$0xff]
    %v42 = vld [vmem:[%s2 + $0x10] sm:$0xff]
    %v43 = vld [vmem:[%s2 + $0x18] sm:$0xff]
    %v44 = vld [vmem:[%s2 + $0x20] sm:$0xff]
    %v45 = vld [vmem:[%s2 + $0x28] sm:$0xff]
    %v46 = vld [vmem:[%s2 + $0x30] sm:$0xff]
    %v47 = vld [vmem:[%s2 + $0x38] sm:$0xff]
    %49 = vset.pattern.permute.xlu0 0
    %50 = vperm.xlu0 %49, %v40
    %v51 = vpop.permute.xlu0 %50
    %54 = vset.pattern.permute.xlu0 0
    %55 = vperm.xlu0 %54, %v41
    %v56 = vpop.permute.xlu0 %55
    %59 = vset.pattern.permute.xlu0 0
    %60 = vperm.xlu0 %59, %v42
    %v61 = vpop.permute.xlu0 %60
    %64 = vset.pattern.permute.xlu0 0
    %65 = vperm.xlu0 %64, %v43
    %v66 = vpop.permute.xlu0 %65
    %69 = vset.pattern.permute.xlu0 0
    %70 = vperm.xlu0 %69, %v44
    %v71 = vpop.permute.xlu0 %70
    %74 = vset.pattern.permute.xlu0 0
    %75 = vperm.xlu0 %74, %v45
    %v76 = vpop.permute.xlu0 %75
    %79 = vset.pattern.permute.xlu0 0
    %80 = vperm.xlu0 %79, %v46
    %v81 = vpop.permute.xlu0 %80
    %84 = vset.pattern.permute.xlu0 0
    %85 = vperm.xlu0 %84, %v47
    %v86 = vpop.permute.xlu0 %85
    %v96 = vunpack.c.l.b16 %v32
    %v97 = vunpack.c.l.b16 %v33
    %v98 = vunpack.c.l.b16 %v34
    %v99 = vunpack.c.l.b16 %v35
    %v100 = vunpack.c.l.b16 %v36
    %v101 = vunpack.c.l.b16 %v37
    %v102 = vunpack.c.l.b16 %v38
    %v103 = vunpack.c.l.b16 %v39
    %v104 = vpack.c.b16 %v97, %v96
    %v105 = vpack.c.b16 %v99, %v98
    %v106 = vpack.c.b16 %v101, %v100
    %v107 = vpack.c.b16 %v103, %v102
    %v110 = vunpack.c.l.b16 %v30
    %v111 = vunpack.c.l.b16 %v31
    %v112 = vpack.c.b16 %v111, %v110
    %vm114 = vcmask 130048
    %v116 = vsel %vm114, %v104, 0
    %v119 = vsel %vm114, %v105, 0
    %v122 = vsel %vm114, %v106, 0
    %v125 = vsel %vm114, %v107, 0
    %127 = vmatpush.bf16.msra.mxu0 0
    %128 = vmatpush.bf16.msra.mxu0 0
    %129 = vmatpush.bf16.msra.mxu0 0
    %130 = vmatpush.bf16.msra.mxu0 0
    %131 = vmatpush.bf16.msra.mxu0 0
    %132 = vmatpush.bf16.msra.mxu0 0
    %133 = vmatpush.bf16.msra.mxu0 0
    %134 = vmatpush.bf16.msra.mxu0 %v112
    %135 = vmatmul.bf16.gmra.mxu0 %v116
    %v136 = vpop.f32.mrf.mxu0
    %v137 = vadd.f32 %v51, %v136
    %v138 = vpop.f32.mrf.mxu0
    %v139 = vadd.f32 %v56, %v138
    %140 = vmatmul.bf16.gmra.mxu0 %v119
    %v141 = vpop.f32.mrf.mxu0
    %v142 = vadd.f32 %v61, %v141
    %v143 = vpop.f32.mrf.mxu0
    %v144 = vadd.f32 %v66, %v143
    %145 = vmatmul.bf16.gmra.mxu0 %v122
    %v146 = vpop.f32.mrf.mxu0
    %v147 = vadd.f32 %v71, %v146
    %v148 = vpop.f32.mrf.mxu0
    %v149 = vadd.f32 %v76, %v148
    %150 = vmatmul.bf16.gmra.mxu0 %v125
    %v151 = vpop.f32.mrf.mxu0
    %v152 = vadd.f32 %v81, %v151
    %v153 = vpop.f32.mrf.mxu0
    %v154 = vadd.f32 %v86, %v153
    %155 = vdwg.mxu0
    %v156 = vmax.f32 %v137, 0.0
    %v157 = vmax.f32 %v139, 0.0
    %v158 = vmax.f32 %v142, 0.0
    %v159 = vmax.f32 %v144, 0.0
    %v160 = vmax.f32 %v147, 0.0
    %v161 = vmax.f32 %v149, 0.0
    %v162 = vmax.f32 %v152, 0.0
    %v163 = vmax.f32 %v154, 0.0
    %v164 = vld [vmem:[%s3] sm:$0xf]
    %v165 = vld [vmem:[%s3 + $0x4] sm:$0xf]
    %v166 = vld [vmem:[%s3 + $0x8] sm:$0xf]
    %v167 = vld [vmem:[%s3 + $0xc] sm:$0xf]
    %v168 = vpack.c.bf16 %v157, %v156
    %v169 = vpack.c.bf16 %v159, %v158
    %v170 = vpack.c.bf16 %v161, %v160
    %v171 = vpack.c.bf16 %v163, %v162
    %v172 = vld [vmem:[%s4] sm:$0xff]
    %v173 = vld [vmem:[%s4 + $0x8] sm:$0xff]
    %v174 = vld [vmem:[%s4 + $0x10] sm:$0xff]
    %v175 = vld [vmem:[%s4 + $0x18] sm:$0xff]
    %177 = vset.pattern.permute.xlu0 0
    %178 = vperm.xlu0 %177, %v172
    %v179 = vpop.permute.xlu0 %178
    %182 = vset.pattern.permute.xlu0 0
    %183 = vperm.xlu0 %182, %v173
    %v184 = vpop.permute.xlu0 %183
    %187 = vset.pattern.permute.xlu0 0
    %188 = vperm.xlu0 %187, %v174
    %v189 = vpop.permute.xlu0 %188
    %192 = vset.pattern.permute.xlu0 0
    %193 = vperm.xlu0 %192, %v175
    %v194 = vpop.permute.xlu0 %193
    %v200 = vunpack.c.l.b16 %v164
    %v201 = vunpack.c.l.b16 %v165
    %v202 = vunpack.c.l.b16 %v166
    %v203 = vunpack.c.l.b16 %v167
    %v204 = vpack.c.b16 %v201, %v200
    %v205 = vpack.c.b16 %v203, %v202
    %vm206 = vcmask 523264
    %v208 = vsel %vm206, %v204, 0
    %v211 = vsel %vm206, %v205, 0
    %213 = vmatpush.bf16.msra.mxu0 0
    %214 = vmatpush.bf16.msra.mxu0 0
    %215 = vmatpush.bf16.msra.mxu0 0
    %216 = vmatpush.bf16.msra.mxu0 0
    %217 = vmatpush.bf16.msra.mxu0 %v171
    %218 = vmatpush.bf16.msra.mxu0 %v170
    %219 = vmatpush.bf16.msra.mxu0 %v169
    %220 = vmatpush.bf16.msra.mxu0 %v168
    %221 = vmatmul.bf16.gmra.mxu0 %v208
    %v222 = vpop.f32.mrf.mxu0
    %v223 = vadd.f32 %v179, %v222
    %v224 = vpop.f32.mrf.mxu0
    %v225 = vadd.f32 %v184, %v224
    %226 = vmatmul.bf16.gmra.mxu0 %v211
    %v227 = vpop.f32.mrf.mxu0
    %v228 = vadd.f32 %v189, %v227
    %v229 = vpop.f32.mrf.mxu0
    %v230 = vadd.f32 %v194, %v229
    %231 = vdwg.mxu0
    %v232 = vmax.f32 %v223, 0.0
    %v233 = vmax.f32 %v225, 0.0
    %v234 = vmax.f32 %v228, 0.0
    %v235 = vmax.f32 %v230, 0.0
    %v236 = vld [vmem:[%s5] sm:$0xff]
    %v237 = vld [vmem:[%s5 + $0x8] sm:$0xff]
    %v238 = vld [vmem:[%s5 + $0x10] sm:$0xff]
    %v239 = vld [vmem:[%s5 + $0x18] sm:$0xff]
    %241 = vset.pattern.permute.xlu0 0
    %242 = vperm.xlu0 %241, %v236
    %v243 = vpop.permute.xlu0 %242
    %246 = vset.pattern.permute.xlu0 0
    %247 = vperm.xlu0 %246, %v237
    %v248 = vpop.permute.xlu0 %247
    %251 = vset.pattern.permute.xlu0 0
    %252 = vperm.xlu0 %251, %v238
    %v253 = vpop.permute.xlu0 %252
    %256 = vset.pattern.permute.xlu0 0
    %257 = vperm.xlu0 %256, %v239
    %v258 = vpop.permute.xlu0 %257
    %v260 = vmul.f32 %v243, %v232
    %v261 = vmul.f32 %v248, %v233
    %v262 = vmul.f32 %v253, %v234
    %v263 = vmul.f32 %v258, %v235
    %v264 = vadd.f32 %v260, %v261
    %v265 = vadd.f32 %v264, %v262
    %v266 = vadd.f32 %v265, %v263
    %v267 = vrot.slane %v266, 4
    %v268 = vadd.f32 %v266, %v267
    %v269 = vrot.slane %v268, 2
    %v270 = vadd.f32 %v268, %v269
    %v271 = vrot.slane %v270, 1
    %v272 = vadd.f32 %v270, %v271
    %v273 = vld [vmem:[#allocation2] sm:$0x1]
    %275 = vset.pattern.permute.xlu0 0
    %276 = vperm.xlu0 %275, %v273
    %v277 = vpop.permute.xlu0 %276
    %v279 = vperm.slane %v277, 0
    %v280 = vadd.f32 %v272, %v279
    %281 = vst [vmem:[#allocation3] sm:$0x1] %v280
    // Predicated region
    $region30: #{tpu_custom_call.1} parent=1 // pred_check
      _
    $region31: #{tpu_custom_call.1} parent=1 // pred_check_branch
      %283 = sbr.rel (0) target = $region33
    $region32: #{tpu_custom_call.1} parent=1 // pred_region
      %285 = vsyncadd [#allocation4], 0
      %s287 = sshll.u32 [#allocation3], 4
      %s288 = int_to_ptr.vmem [resolvable:$true] %s287
      %s289 = sshll.u32 %s7, 4
      %s290 = int_to_ptr.hbm [resolvable:$true] %s289
      %292 = dma.vmem_to_hbm [thread:$0]  %s288, 16, %s290, [#allocation4]
    $region33: #{tpu_custom_call.1} parent=1 // pred_fallthru
      _
    // Predicated region
    $region34: #{tpu_custom_call.1} parent=1 // pred_check
      _
    $region35: #{tpu_custom_call.1} parent=1 // pred_check_branch
      %294 = sbr.rel (0) target = $region37
    $region36: #{tpu_custom_call.1} parent=1 // pred_region
      %296 = dma.done [#allocation4], 16
    $region37: #{tpu_custom_call.1} parent=1 // pred_fallthru
      _
    %297 = vsyncpa [#allocation4], 1

</llo_original>
